<compile_context>
chip_gen: v7x
topology: tpu7x:2x2x1
jax: 0.10.0
libtpu: 0.0.40
codegen_flags: <defaults>
</compile_context>

<pallas_src>
import math
import jax
import jax.numpy as jnp
from jax.experimental import pallas as pl
from jax.experimental.pallas import tpu as pltpu


def _round_up(x, m):
    return ((x + m - 1) // m) * m


def _cdiv(a, b):
    return -(-a // b)


_VMEM_BUDGET_BYTES = 8 * 1024 * 1024   # per-step working set (incl. double buffering)
_LANE_TILE_CAP = 4096                  # max lane (H*W) tile width
_MAX_BBLK = 16                         # kernel unroll cap over the batch block
_MIN_GRID_STEPS = 8                    # keep megacore / pipelining busy on big problems
_DMA_FLOOR_BYTES = 256 * 1024          # don't shrink per-step input DMAs below this


def _sublane(itemsize):
    # f32 -> 8 sublanes, bf16 -> 16, int8 -> 32 (packed dtypes pack along sublanes)
    return max(8, 32 // itemsize)


def _choose_tiles(B, C, Cout, HW, itemsize):
    """Pick (Bblk, TL, n_hw, hw_pad).  hw_pad == HW unless the rare pad fallback hits."""
    sub = _sublane(itemsize)
    c_pad = _round_up(C, sub)        # sublane-padded channel rows actually held in VMEM
    co_pad = _round_up(Cout, sub)

    def per_sample_bytes(tl):
        # 2 inputs + 1 output, each double-buffered by the pipeline, sublane-padded.
        return itemsize * tl * (2 * 2 * c_pad + 2 * co_pad)

    hw_pad = HW
    if HW % 128 == 0:
        if HW > _LANE_TILE_CAP:
            n_hw = _cdiv(HW, _LANE_TILE_CAP)
            TL = _round_up(_cdiv(HW, n_hw), 128)
            n_hw = _cdiv(HW, TL)
        else:
            TL, n_hw = HW, 1
    else:
        if per_sample_bytes(HW) <= _VMEM_BUDGET_BYTES:
            # Full-extent lane block: exempt from the 128-divisibility rule, no pad,
            # at worst a masked tail store.
            TL, n_hw = HW, 1
        else:
            # Rare: huge, 128-unaligned H*W -> pad (one extra HBM pass) and tile.
            hw_pad = _round_up(HW, 128)
            n_hw = _cdiv(hw_pad, _LANE_TILE_CAP)
            TL = _round_up(_cdiv(hw_pad, n_hw), 128)
            n_hw = _cdiv(hw_pad, TL)

    bblk_vmem = max(1, _VMEM_BUDGET_BYTES // per_sample_bytes(TL))
    Bblk = max(1, min(B, bblk_vmem, _MAX_BBLK))

    # Cap Bblk to keep >= _MIN_GRID_STEPS grid steps (megacore / pipelining), but only
    # when that doesn't push per-step input DMAs below the floor.
    steps_on_b = max(1, _cdiv(_MIN_GRID_STEPS, n_hw))
    bblk_steps = max(1, B // steps_on_b)
    bblk_floor = max(1, _DMA_FLOOR_BYTES // (itemsize * c_pad * TL))
    if bblk_steps >= bblk_floor:
        Bblk = max(1, min(Bblk, bblk_steps))

    return Bblk, TL, n_hw, hw_pad


def _fuse_kernel(xs_ref, xr_ref, wf_ref, wr_ref, b_ref, o_ref):
    # out[b] = leaky_relu_0.1( Wf @ xs[b] + Wr @ xr[b] + bias )
    wf = wf_ref[...]                  # (Cout, C)
    wr = wr_ref[...]                  # (Cout, C)
    bias = b_ref[...]                 # (Cout, 1), f32, lane-broadcast
    nb = xs_ref.shape[0]
    for bb in range(nb):              # static unroll; nb <= _MAX_BBLK
        acc = jnp.dot(wf, xs_ref[bb], preferred_element_type=jnp.float32)
        acc = acc + jnp.dot(wr, xr_ref[bb], preferred_element_type=jnp.float32)
        acc = acc + bias
        o_ref[bb] = jnp.where(acc >= 0, acc, 0.1 * acc).astype(o_ref.dtype)


@jax.jit
def fuse_level_pallas(x_seq, x_rev, w, b):
    """One level, all timesteps at once.

    x_seq, x_rev: (T, N, C, H, W)   NCHW per timestep, stacked over T
    w:            (Cout, 2C, 1, 1)  Conv2d 1x1 weight
    b:            (Cout,)
    returns       (T, N, Cout, H, W)
    """
    T, N, C, H, W = x_seq.shape
    Cout = w.shape[0]
    B, HW = T * N, H * W
    dtype = x_seq.dtype
    itemsize = jnp.dtype(dtype).itemsize

    # NCHW is already channels-then-pixels: reshape (layout-free) to (B, C, HW).
    xs = x_seq.reshape(B, C, HW)
    xr = x_rev.reshape(B, C, HW)

    Bblk, TL, n_hw, hw_pad = _choose_tiles(B, C, Cout, HW, itemsize)
    if hw_pad != HW:
        # TODO(synk): only reached for very large 128-unaligned H*W; costs one extra
        # HBM read/write pass for the pad + slice.
        pad = ((0, 0), (0, 0), (0, hw_pad - HW))
        xs = jnp.pad(xs, pad)
        xr = jnp.pad(xr, pad)

    wf = w[:, :C, 0, 0].astype(dtype)     # (Cout, C) -- multiplies x_seq
    wr = w[:, C:, 0, 0].astype(dtype)     # (Cout, C) -- multiplies x_rev
    bias = b.reshape(Cout, 1).astype(jnp.float32)

    n_b = _cdiv(B, Bblk)
    out = pl.pallas_call(
        _fuse_kernel,
        out_shape=jax.ShapeDtypeStruct((B, Cout, hw_pad), dtype),
        grid_spec=pltpu.PrefetchScalarGridSpec(
            num_scalar_prefetch=0,
            grid=(n_b, n_hw),
            in_specs=[
                pl.BlockSpec((Bblk, C, TL), lambda i, j: (i, 0, j)),
                pl.BlockSpec((Bblk, C, TL), lambda i, j: (i, 0, j)),
                pl.BlockSpec((Cout, C), lambda i, j: (0, 0)),
                pl.BlockSpec((Cout, C), lambda i, j: (0, 0)),
                pl.BlockSpec((Cout, 1), lambda i, j: (0, 0)),
            ],
            out_specs=pl.BlockSpec((Bblk, Cout, TL), lambda i, j: (i, 0, j)),
        ),
        compiler_params=pltpu.CompilerParams(
            dimension_semantics=("parallel", "parallel"),
            vmem_limit_bytes=32 * 1024 * 1024,
        ),
    )(xs, xr, wf, wr, bias)

    if hw_pad != HW:
        out = out[:, :, :HW]
    return out.reshape(T, N, Cout, H, W)


class SeqRevFuseMSPallas:
    """JAX/Pallas equivalent of the PyTorch SeqRevFuseMS module."""

    def __init__(self, dims, key):
        self.dims = tuple(dims)
        self.params = []
        for i, d in enumerate(self.dims):
            kw, kb = jax.random.split(jax.random.fold_in(key, i))
            fan_in = 2 * d  # Conv2d(2d -> d, k=1): fan_in = 2d * 1 * 1
            bound = 1.0 / math.sqrt(fan_in)
            w = jax.random.uniform(kw, (d, 2 * d, 1, 1), jnp.float32, -bound, bound)
            b = jax.random.uniform(kb, (d,), jnp.float32, -bound, bound)
            self.params.append((w, b))

    def __call__(self, x_ms_seq, x_ms_rev):
        T = len(x_ms_seq)
        per_level = []
        for lvl, (w, b) in enumerate(self.params):
            # TODO(synk): the stack below is one avoidable HBM copy forced by the
            # list-of-lists module interface; upstream BiLSTM should emit stacked
            # (T, N, C, H, W) tensors and call fuse_level_pallas directly.
            xs = jnp.stack([x_ms_seq[t][lvl] for t in range(T)], axis=0)
            xr = jnp.stack([x_ms_rev[t][lvl] for t in range(T)], axis=0)
            per_level.append(fuse_level_pallas(xs, xr, w, b))
        # Repack to the module's list-over-timesteps of list-over-levels output.
        return [[per_level[lvl][t] for lvl in range(len(self.params))]
                for t in range(T)]

    # pure-JAX reference (mirrors PyTorch forward exactly) for validation
    def reference(self, x_ms_seq, x_ms_rev):
        outs = []
        for t in range(len(x_ms_seq)):
            node = []
            for (w, b), x_seq, x_rev in zip(self.params, x_ms_seq[t], x_ms_rev[t]):
                cat = jnp.concatenate([x_seq, x_rev], axis=1)              # (N, 2C, H, W)
                y = jnp.einsum("nchw,oc->nohw", cat, w[:, :, 0, 0])        # 1x1 conv
                y = y + b[None, :, None, None]
                y = jnp.where(y >= 0, y, 0.1 * y)                          # LeakyReLU(0.1)
                node.append(y)
            outs.append(node)
        return outs


if __name__ == "__main__":
    key = jax.random.PRNGKey(0)
    dims = (4, 8)          # multi-scale channel dims
    spatials = (16, 8)     # matching spatial sizes per level
    T, N = 3, 2

    module = SeqRevFuseMSPallas(dims, jax.random.fold_in(key, 1000))

    # build x_ms_seq / x_ms_rev: lists over T of lists over levels, NCHW
    x_ms_seq, x_ms_rev = [], []
    k = jax.random.fold_in(key, 2000)
    for t in range(T):
        seq_lvls, rev_lvls = [], []
        for lvl, (c, s) in enumerate(zip(dims, spatials)):
            k, k1, k2 = jax.random.split(k, 3)
            seq_lvls.append(jax.random.normal(k1, (N, c, s, s), jnp.float32))
            rev_lvls.append(jax.random.normal(k2, (N, c, s, s), jnp.float32))
        x_ms_seq.append(seq_lvls)
        x_ms_rev.append(rev_lvls)

    out = module(x_ms_seq, x_ms_rev)
    ref = module.reference(x_ms_seq, x_ms_rev)

    # block on results and check against the pure-JAX reference
    for t in range(T):
        for lvl in range(len(dims)):
            o = jax.block_until_ready(out[t][lvl])
            r = ref[t][lvl]
            assert o.shape == (N, dims[lvl], spatials[lvl], spatials[lvl])
            assert jnp.allclose(o, r, atol=1e-5, rtol=1e-5), (t, lvl)

    print("KERNEL_OK")
</pallas_src>

<mosaic_0001>
module attributes {stable_mosaic.version = 11 : i64} {
  func.func @_fuse_kernel(%arg0: i32, %arg1: i32, %arg2: memref<6x4x256xf32, #tpu.memory_space<vmem>>, %arg3: memref<6x4x256xf32, #tpu.memory_space<vmem>>, %arg4: memref<4x4xf32, #tpu.memory_space<vmem>>, %arg5: memref<4x4xf32, #tpu.memory_space<vmem>>, %arg6: memref<4x1xf32, #tpu.memory_space<vmem>>, %arg7: memref<6x4x256xf32, #tpu.memory_space<vmem>>) attributes {dimension_semantics = [#tpu.dimension_semantics<parallel>, #tpu.dimension_semantics<parallel>], iteration_bounds = array<i64: 1, 1>, scalar_prefetch = 0 : i64, scratch_operands = 0 : i64, tpu.core_type = #tpu.core_type<tc>, window_params = [{transform_indices = @transform_0, window_bounds = array<i64: 6, 4, 256>}, {transform_indices = @transform_1, window_bounds = array<i64: 6, 4, 256>}, {pipeline_mode = #tpu.pipeline_mode<synchronous>, transform_indices = @transform_2, window_bounds = array<i64: 4, 4>}, {pipeline_mode = #tpu.pipeline_mode<synchronous>, transform_indices = @transform_3, window_bounds = array<i64: 4, 4>}, {pipeline_mode = #tpu.pipeline_mode<synchronous>, transform_indices = @transform_4, window_bounds = array<i64: 4, 1>}, {transform_indices = @transform_5, window_bounds = array<i64: 6, 4, 256>}]} {
    %c0 = arith.constant 0 : index
    %c0_0 = arith.constant 0 : index
    %0 = vector.load %arg4[%c0, %c0_0] : memref<4x4xf32, #tpu.memory_space<vmem>>, vector<4x4xf32>
    %c0_1 = arith.constant 0 : index
    %c0_2 = arith.constant 0 : index
    %1 = vector.load %arg5[%c0_1, %c0_2] : memref<4x4xf32, #tpu.memory_space<vmem>>, vector<4x4xf32>
    %c0_3 = arith.constant 0 : index
    %c0_4 = arith.constant 0 : index
    %2 = vector.load %arg6[%c0_3, %c0_4] : memref<4x1xf32, #tpu.memory_space<vmem>>, vector<4x1xf32>
    %c0_5 = arith.constant 0 : index
    %c0_6 = arith.constant 0 : index
    %c0_7 = arith.constant 0 : index
    %3 = vector.load %arg2[%c0_5, %c0_6, %c0_7] : memref<6x4x256xf32, #tpu.memory_space<vmem>>, vector<1x4x256xf32>
    %4 = vector.shape_cast %3 : vector<1x4x256xf32> to vector<4x256xf32>
    %cst = arith.constant dense<0.000000e+00> : vector<4x256xf32>
    %5 = tpu.matmul %0, %4, %cst {dimension_numbers = #tpu.dot_dimension_numbers<[1], [0], [0], [1], [0, 0, 1, 1], [], []>} : vector<4x4xf32>, vector<4x256xf32>, vector<4x256xf32> -> vector<4x256xf32>
    %c0_8 = arith.constant 0 : index
    %c0_9 = arith.constant 0 : index
    %c0_10 = arith.constant 0 : index
    %6 = vector.load %arg3[%c0_8, %c0_9, %c0_10] : memref<6x4x256xf32, #tpu.memory_space<vmem>>, vector<1x4x256xf32>
    %7 = vector.shape_cast %6 : vector<1x4x256xf32> to vector<4x256xf32>
    %cst_11 = arith.constant dense<0.000000e+00> : vector<4x256xf32>
    %8 = tpu.matmul %1, %7, %cst_11 {dimension_numbers = #tpu.dot_dimension_numbers<[1], [0], [0], [1], [0, 0, 1, 1], [], []>} : vector<4x4xf32>, vector<4x256xf32>, vector<4x256xf32> -> vector<4x256xf32>
    %9 = arith.addf %5, %8 : vector<4x256xf32>
    %10 = vector.broadcast %2 : vector<4x1xf32> to vector<4x256xf32>
    %11 = arith.addf %9, %10 : vector<4x256xf32>
    %cst_12 = arith.constant 0.000000e+00 : f32
    %12 = vector.broadcast %cst_12 : f32 to vector<4x256xf32>
    %13 = arith.cmpf oge, %11, %12 : vector<4x256xf32>
    %cst_13 = arith.constant 1.000000e-01 : f32
    %14 = vector.broadcast %cst_13 : f32 to vector<4x256xf32>
    %15 = arith.mulf %14, %11 : vector<4x256xf32>
    %16 = arith.select %13, %11, %15 : vector<4x256xi1>, vector<4x256xf32>
    %c0_14 = arith.constant 0 : index
    %c0_15 = arith.constant 0 : index
    %c0_16 = arith.constant 0 : index
    %17 = vector.load %arg7[%c0_14, %c0_15, %c0_16] : memref<6x4x256xf32, #tpu.memory_space<vmem>>, vector<1x4x256xf32>
    %18 = vector.shape_cast %17 : vector<1x4x256xf32> to vector<4x256xf32>
    %19 = vector.shape_cast %16 : vector<4x256xf32> to vector<1x4x256xf32>
    tpu.vector_store %arg7[%c0_14, %c0_15, %c0_16], %19 {strides = array<i32>} : memref<6x4x256xf32, #tpu.memory_space<vmem>>, vector<1x4x256xf32>,
    %c1 = arith.constant 1 : index
    %c0_17 = arith.constant 0 : index
    %c0_18 = arith.constant 0 : index
    %20 = vector.load %arg2[%c1, %c0_17, %c0_18] : memref<6x4x256xf32, #tpu.memory_space<vmem>>, vector<1x4x256xf32>
    %21 = vector.shape_cast %20 : vector<1x4x256xf32> to vector<4x256xf32>
    %cst_19 = arith.constant dense<0.000000e+00> : vector<4x256xf32>
    %22 = tpu.matmul %0, %21, %cst_19 {dimension_numbers = #tpu.dot_dimension_numbers<[1], [0], [0], [1], [0, 0, 1, 1], [], []>} : vector<4x4xf32>, vector<4x256xf32>, vector<4x256xf32> -> vector<4x256xf32>
    %c1_20 = arith.constant 1 : index
    %c0_21 = arith.constant 0 : index
    %c0_22 = arith.constant 0 : index
    %23 = vector.load %arg3[%c1_20, %c0_21, %c0_22] : memref<6x4x256xf32, #tpu.memory_space<vmem>>, vector<1x4x256xf32>
    %24 = vector.shape_cast %23 : vector<1x4x256xf32> to vector<4x256xf32>
    %cst_23 = arith.constant dense<0.000000e+00> : vector<4x256xf32>
    %25 = tpu.matmul %1, %24, %cst_23 {dimension_numbers = #tpu.dot_dimension_numbers<[1], [0], [0], [1], [0, 0, 1, 1], [], []>} : vector<4x4xf32>, vector<4x256xf32>, vector<4x256xf32> -> vector<4x256xf32>
    %26 = arith.addf %22, %25 : vector<4x256xf32>
    %27 = vector.broadcast %2 : vector<4x1xf32> to vector<4x256xf32>
    %28 = arith.addf %26, %27 : vector<4x256xf32>
    %cst_24 = arith.constant 0.000000e+00 : f32
    %29 = vector.broadcast %cst_24 : f32 to vector<4x256xf32>
    %30 = arith.cmpf oge, %28, %29 : vector<4x256xf32>
    %cst_25 = arith.constant 1.000000e-01 : f32
    %31 = vector.broadcast %cst_25 : f32 to vector<4x256xf32>
    %32 = arith.mulf %31, %28 : vector<4x256xf32>
    %33 = arith.select %30, %28, %32 : vector<4x256xi1>, vector<4x256xf32>
    %c1_26 = arith.constant 1 : index
    %c0_27 = arith.constant 0 : index
    %c0_28 = arith.constant 0 : index
    %34 = vector.load %arg7[%c1_26, %c0_27, %c0_28] : memref<6x4x256xf32, #tpu.memory_space<vmem>>, vector<1x4x256xf32>
    %35 = vector.shape_cast %34 : vector<1x4x256xf32> to vector<4x256xf32>
    %36 = vector.shape_cast %33 : vector<4x256xf32> to vector<1x4x256xf32>
    tpu.vector_store %arg7[%c1_26, %c0_27, %c0_28], %36 {strides = array<i32>} : memref<6x4x256xf32, #tpu.memory_space<vmem>>, vector<1x4x256xf32>,
    %c2 = arith.constant 2 : index
    %c0_29 = arith.constant 0 : index
    %c0_30 = arith.constant 0 : index
    %37 = vector.load %arg2[%c2, %c0_29, %c0_30] : memref<6x4x256xf32, #tpu.memory_space<vmem>>, vector<1x4x256xf32>
    %38 = vector.shape_cast %37 : vector<1x4x256xf32> to vector<4x256xf32>
    %cst_31 = arith.constant dense<0.000000e+00> : vector<4x256xf32>
    %39 = tpu.matmul %0, %38, %cst_31 {dimension_numbers = #tpu.dot_dimension_numbers<[1], [0], [0], [1], [0, 0, 1, 1], [], []>} : vector<4x4xf32>, vector<4x256xf32>, vector<4x256xf32> -> vector<4x256xf32>
    %c2_32 = arith.constant 2 : index
    %c0_33 = arith.constant 0 : index
    %c0_34 = arith.constant 0 : index
    %40 = vector.load %arg3[%c2_32, %c0_33, %c0_34] : memref<6x4x256xf32, #tpu.memory_space<vmem>>, vector<1x4x256xf32>
    %41 = vector.shape_cast %40 : vector<1x4x256xf32> to vector<4x256xf32>
    %cst_35 = arith.constant dense<0.000000e+00> : vector<4x256xf32>
    %42 = tpu.matmul %1, %41, %cst_35 {dimension_numbers = #tpu.dot_dimension_numbers<[1], [0], [0], [1], [0, 0, 1, 1], [], []>} : vector<4x4xf32>, vector<4x256xf32>, vector<4x256xf32> -> vector<4x256xf32>
    %43 = arith.addf %39, %42 : vector<4x256xf32>
    %44 = vector.broadcast %2 : vector<4x1xf32> to vector<4x256xf32>
    %45 = arith.addf %43, %44 : vector<4x256xf32>
    %cst_36 = arith.constant 0.000000e+00 : f32
    %46 = vector.broadcast %cst_36 : f32 to vector<4x256xf32>
    %47 = arith.cmpf oge, %45, %46 : vector<4x256xf32>
    %cst_37 = arith.constant 1.000000e-01 : f32
    %48 = vector.broadcast %cst_37 : f32 to vector<4x256xf32>
    %49 = arith.mulf %48, %45 : vector<4x256xf32>
    %50 = arith.select %47, %45, %49 : vector<4x256xi1>, vector<4x256xf32>
    %c2_38 = arith.constant 2 : index
    %c0_39 = arith.constant 0 : index
    %c0_40 = arith.constant 0 : index
    %51 = vector.load %arg7[%c2_38, %c0_39, %c0_40] : memref<6x4x256xf32, #tpu.memory_space<vmem>>, vector<1x4x256xf32>
    %52 = vector.shape_cast %51 : vector<1x4x256xf32> to vector<4x256xf32>
    %53 = vector.shape_cast %50 : vector<4x256xf32> to vector<1x4x256xf32>
    tpu.vector_store %arg7[%c2_38, %c0_39, %c0_40], %53 {strides = array<i32>} : memref<6x4x256xf32, #tpu.memory_space<vmem>>, vector<1x4x256xf32>,
    %c3 = arith.constant 3 : index
    %c0_41 = arith.constant 0 : index
    %c0_42 = arith.constant 0 : index
    %54 = vector.load %arg2[%c3, %c0_41, %c0_42] : memref<6x4x256xf32, #tpu.memory_space<vmem>>, vector<1x4x256xf32>
    %55 = vector.shape_cast %54 : vector<1x4x256xf32> to vector<4x256xf32>
    %cst_43 = arith.constant dense<0.000000e+00> : vector<4x256xf32>
    %56 = tpu.matmul %0, %55, %cst_43 {dimension_numbers = #tpu.dot_dimension_numbers<[1], [0], [0], [1], [0, 0, 1, 1], [], []>} : vector<4x4xf32>, vector<4x256xf32>, vector<4x256xf32> -> vector<4x256xf32>
    %c3_44 = arith.constant 3 : index
    %c0_45 = arith.constant 0 : index
    %c0_46 = arith.constant 0 : index
    %57 = vector.load %arg3[%c3_44, %c0_45, %c0_46] : memref<6x4x256xf32, #tpu.memory_space<vmem>>, vector<1x4x256xf32>
    %58 = vector.shape_cast %57 : vector<1x4x256xf32> to vector<4x256xf32>
    %cst_47 = arith.constant dense<0.000000e+00> : vector<4x256xf32>
    %59 = tpu.matmul %1, %58, %cst_47 {dimension_numbers = #tpu.dot_dimension_numbers<[1], [0], [0], [1], [0, 0, 1, 1], [], []>} : vector<4x4xf32>, vector<4x256xf32>, vector<4x256xf32> -> vector<4x256xf32>
    %60 = arith.addf %56, %59 : vector<4x256xf32>
    %61 = vector.broadcast %2 : vector<4x1xf32> to vector<4x256xf32>
    %62 = arith.addf %60, %61 : vector<4x256xf32>
    %cst_48 = arith.constant 0.000000e+00 : f32
    %63 = vector.broadcast %cst_48 : f32 to vector<4x256xf32>
    %64 = arith.cmpf oge, %62, %63 : vector<4x256xf32>
    %cst_49 = arith.constant 1.000000e-01 : f32
    %65 = vector.broadcast %cst_49 : f32 to vector<4x256xf32>
    %66 = arith.mulf %65, %62 : vector<4x256xf32>
    %67 = arith.select %64, %62, %66 : vector<4x256xi1>, vector<4x256xf32>
    %c3_50 = arith.constant 3 : index
    %c0_51 = arith.constant 0 : index
    %c0_52 = arith.constant 0 : index
    %68 = vector.load %arg7[%c3_50, %c0_51, %c0_52] : memref<6x4x256xf32, #tpu.memory_space<vmem>>, vector<1x4x256xf32>
    %69 = vector.shape_cast %68 : vector<1x4x256xf32> to vector<4x256xf32>
    %70 = vector.shape_cast %67 : vector<4x256xf32> to vector<1x4x256xf32>
    tpu.vector_store %arg7[%c3_50, %c0_51, %c0_52], %70 {strides = array<i32>} : memref<6x4x256xf32, #tpu.memory_space<vmem>>, vector<1x4x256xf32>,
    %c4 = arith.constant 4 : index
    %c0_53 = arith.constant 0 : index
    %c0_54 = arith.constant 0 : index
    %71 = vector.load %arg2[%c4, %c0_53, %c0_54] : memref<6x4x256xf32, #tpu.memory_space<vmem>>, vector<1x4x256xf32>
    %72 = vector.shape_cast %71 : vector<1x4x256xf32> to vector<4x256xf32>
    %cst_55 = arith.constant dense<0.000000e+00> : vector<4x256xf32>
    %73 = tpu.matmul %0, %72, %cst_55 {dimension_numbers = #tpu.dot_dimension_numbers<[1], [0], [0], [1], [0, 0, 1, 1], [], []>} : vector<4x4xf32>, vector<4x256xf32>, vector<4x256xf32> -> vector<4x256xf32>
    %c4_56 = arith.constant 4 : index
    %c0_57 = arith.constant 0 : index
    %c0_58 = arith.constant 0 : index
    %74 = vector.load %arg3[%c4_56, %c0_57, %c0_58] : memref<6x4x256xf32, #tpu.memory_space<vmem>>, vector<1x4x256xf32>
    %75 = vector.shape_cast %74 : vector<1x4x256xf32> to vector<4x256xf32>
    %cst_59 = arith.constant dense<0.000000e+00> : vector<4x256xf32>
    %76 = tpu.matmul %1, %75, %cst_59 {dimension_numbers = #tpu.dot_dimension_numbers<[1], [0], [0], [1], [0, 0, 1, 1], [], []>} : vector<4x4xf32>, vector<4x256xf32>, vector<4x256xf32> -> vector<4x256xf32>
    %77 = arith.addf %73, %76 : vector<4x256xf32>
    %78 = vector.broadcast %2 : vector<4x1xf32> to vector<4x256xf32>
    %79 = arith.addf %77, %78 : vector<4x256xf32>
    %cst_60 = arith.constant 0.000000e+00 : f32
    %80 = vector.broadcast %cst_60 : f32 to vector<4x256xf32>
    %81 = arith.cmpf oge, %79, %80 : vector<4x256xf32>
    %cst_61 = arith.constant 1.000000e-01 : f32
    %82 = vector.broadcast %cst_61 : f32 to vector<4x256xf32>
    %83 = arith.mulf %82, %79 : vector<4x256xf32>
    %84 = arith.select %81, %79, %83 : vector<4x256xi1>, vector<4x256xf32>
    %c4_62 = arith.constant 4 : index
    %c0_63 = arith.constant 0 : index
    %c0_64 = arith.constant 0 : index
    %85 = vector.load %arg7[%c4_62, %c0_63, %c0_64] : memref<6x4x256xf32, #tpu.memory_space<vmem>>, vector<1x4x256xf32>
    %86 = vector.shape_cast %85 : vector<1x4x256xf32> to vector<4x256xf32>
    %87 = vector.shape_cast %84 : vector<4x256xf32> to vector<1x4x256xf32>
    tpu.vector_store %arg7[%c4_62, %c0_63, %c0_64], %87 {strides = array<i32>} : memref<6x4x256xf32, #tpu.memory_space<vmem>>, vector<1x4x256xf32>,
    %c5 = arith.constant 5 : index
    %c0_65 = arith.constant 0 : index
    %c0_66 = arith.constant 0 : index
    %88 = vector.load %arg2[%c5, %c0_65, %c0_66] : memref<6x4x256xf32, #tpu.memory_space<vmem>>, vector<1x4x256xf32>
    %89 = vector.shape_cast %88 : vector<1x4x256xf32> to vector<4x256xf32>
    %cst_67 = arith.constant dense<0.000000e+00> : vector<4x256xf32>
    %90 = tpu.matmul %0, %89, %cst_67 {dimension_numbers = #tpu.dot_dimension_numbers<[1], [0], [0], [1], [0, 0, 1, 1], [], []>} : vector<4x4xf32>, vector<4x256xf32>, vector<4x256xf32> -> vector<4x256xf32>
    %c5_68 = arith.constant 5 : index
    %c0_69 = arith.constant 0 : index
    %c0_70 = arith.constant 0 : index
    %91 = vector.load %arg3[%c5_68, %c0_69, %c0_70] : memref<6x4x256xf32, #tpu.memory_space<vmem>>, vector<1x4x256xf32>
    %92 = vector.shape_cast %91 : vector<1x4x256xf32> to vector<4x256xf32>
    %cst_71 = arith.constant dense<0.000000e+00> : vector<4x256xf32>
    %93 = tpu.matmul %1, %92, %cst_71 {dimension_numbers = #tpu.dot_dimension_numbers<[1], [0], [0], [1], [0, 0, 1, 1], [], []>} : vector<4x4xf32>, vector<4x256xf32>, vector<4x256xf32> -> vector<4x256xf32>
    %94 = arith.addf %90, %93 : vector<4x256xf32>
    %95 = vector.broadcast %2 : vector<4x1xf32> to vector<4x256xf32>
    %96 = arith.addf %94, %95 : vector<4x256xf32>
    %cst_72 = arith.constant 0.000000e+00 : f32
    %97 = vector.broadcast %cst_72 : f32 to vector<4x256xf32>
    %98 = arith.cmpf oge, %96, %97 : vector<4x256xf32>
    %cst_73 = arith.constant 1.000000e-01 : f32
    %99 = vector.broadcast %cst_73 : f32 to vector<4x256xf32>
    %100 = arith.mulf %99, %96 : vector<4x256xf32>
    %101 = arith.select %98, %96, %100 : vector<4x256xi1>, vector<4x256xf32>
    %c5_74 = arith.constant 5 : index
    %c0_75 = arith.constant 0 : index
    %c0_76 = arith.constant 0 : index
    %102 = vector.load %arg7[%c5_74, %c0_75, %c0_76] : memref<6x4x256xf32, #tpu.memory_space<vmem>>, vector<1x4x256xf32>
    %103 = vector.shape_cast %102 : vector<1x4x256xf32> to vector<4x256xf32>
    %104 = vector.shape_cast %101 : vector<4x256xf32> to vector<1x4x256xf32>
    tpu.vector_store %arg7[%c5_74, %c0_75, %c0_76], %104 {strides = array<i32>} : memref<6x4x256xf32, #tpu.memory_space<vmem>>, vector<1x4x256xf32>,
    return
  }
  func.func @transform_0(%arg0: i32, %arg1: i32) -> (i32, i32, i32) {
    %c0_i32 = arith.constant 0 : i32
    %c0_i32_0 = arith.constant 0 : i32
    return %arg0, %c0_i32, %arg1 : i32, i32, i32
  }
  func.func @transform_1(%arg0: i32, %arg1: i32) -> (i32, i32, i32) {
    %c0_i32 = arith.constant 0 : i32
    %c0_i32_0 = arith.constant 0 : i32
    return %arg0, %c0_i32, %arg1 : i32, i32, i32
  }
  func.func @transform_2(%arg0: i32, %arg1: i32) -> (i32, i32) {
    %c0_i32 = arith.constant 0 : i32
    %c0_i32_0 = arith.constant 0 : i32
    %c0_i32_1 = arith.constant 0 : i32
    return %c0_i32, %c0_i32_0 : i32, i32
  }
  func.func @transform_3(%arg0: i32, %arg1: i32) -> (i32, i32) {
    %c0_i32 = arith.constant 0 : i32
    %c0_i32_0 = arith.constant 0 : i32
    %c0_i32_1 = arith.constant 0 : i32
    return %c0_i32, %c0_i32_0 : i32, i32
  }
  func.func @transform_4(%arg0: i32, %arg1: i32) -> (i32, i32) {
    %c0_i32 = arith.constant 0 : i32
    %c0_i32_0 = arith.constant 0 : i32
    %c0_i32_1 = arith.constant 0 : i32
    return %c0_i32, %c0_i32_0 : i32, i32
  }
  func.func @transform_5(%arg0: i32, %arg1: i32) -> (i32, i32, i32) {
    %c0_i32 = arith.constant 0 : i32
    %c0_i32_0 = arith.constant 0 : i32
    return %arg0, %c0_i32, %arg1 : i32, i32, i32
  }
}

</mosaic_0001>

<llo_original>
// kernel: fuse_level_pallas.1
$region0: #{fuse_level_pallas.1}
  #allocation0 [shape = 'u32[]', space=smem, size = 0x4, offset = 0x4, fixed_abs, tag = 'smem constant byte address 0x4 - core index']
  #allocation1 [shape = 'u32[144,128]{1,0:T(1,128)}', space=vmem, size = 0x12000, scoped, tag = 'internal scratch']
  %s0 = inlined_call_operand.vmem [shape: f32[6,4,256], index: 0, kind: input, shape index: {}]
  %s1 = inlined_call_operand.vmem [shape: f32[6,4,256], index: 1, kind: input, shape index: {}]
  %s2 = inlined_call_operand.vmem [shape: f32[4,4], index: 2, kind: input, shape index: {}]
  %s3 = inlined_call_operand.vmem [shape: f32[4,4], index: 3, kind: input, shape index: {}]
  %s4 = inlined_call_operand.vmem [shape: f32[4,1], index: 4, kind: input, shape index: {}]
  %s5 = inlined_call_operand.vmem [shape: f32[6,4,256], index: 5, kind: output, shape index: {}]
  %s6 = sld [smem:[#allocation0]]
  $region30: #{fuse_level_pallas.1} parent=0
    _
  %s8 = ssub.s32 1, %s6
  %s9 = scalar_select 0, %s8, %s6
  // Predicated region
  $region2: #{fuse_level_pallas.1} parent=0 // pred_check
    _
  $region3: #{fuse_level_pallas.1} parent=0 // pred_check_branch
    %11 = sbr.rel (0) target = $region5
  $region4: #{fuse_level_pallas.1} parent=0 // pred_region
    _
  $region5: #{fuse_level_pallas.1} parent=0 // pred_fallthru
    _
  // Predicated region
  $region6: #{fuse_level_pallas.1} parent=0 // pred_check
    _
  $region7: #{fuse_level_pallas.1} parent=0 // pred_check_branch
    %13 = sbr.rel (0) target = $region9
  $region8: #{fuse_level_pallas.1} parent=0 // pred_region
    _
  $region9: #{fuse_level_pallas.1} parent=0 // pred_fallthru
    _
  // Predicated region
  $region10: #{fuse_level_pallas.1} parent=0 // pred_check
    _
  $region11: #{fuse_level_pallas.1} parent=0 // pred_check_branch
    %15 = sbr.rel (0) target = $region13
  $region12: #{fuse_level_pallas.1} parent=0 // pred_region
    _
  $region13: #{fuse_level_pallas.1} parent=0 // pred_fallthru
    _
  // Predicated region
  $region14: #{fuse_level_pallas.1} parent=0 // pred_check
    _
  $region15: #{fuse_level_pallas.1} parent=0 // pred_check_branch
    %17 = sbr.rel (0) target = $region17
  $region16: #{fuse_level_pallas.1} parent=0 // pred_region
    _
  $region17: #{fuse_level_pallas.1} parent=0 // pred_fallthru
    _
  // Predicated region
  $region18: #{fuse_level_pallas.1} parent=0 // pred_check
    _
  $region19: #{fuse_level_pallas.1} parent=0 // pred_check_branch
    %19 = sbr.rel (0) target = $region21
  $region20: #{fuse_level_pallas.1} parent=0 // pred_region
    _
  $region21: #{fuse_level_pallas.1} parent=0 // pred_fallthru
    _
  %v20 = vld [vmem:[%s2] sm:$0xf]
  %v21 = vld [vmem:[%s3] sm:$0xf]
  %v22 = vld [vmem:[%s4] sm:$0xf]
  %v23 = vld [vmem:[%s0] sm:$0xff]
  %v24 = vld [vmem:[%s1] sm:$0xff]
  %v26 = vcombine.high %v24, %v24
  %vm27 = vcmask 31744
  %v29 = vsel %vm27, %v21, 0
  %vm31 = vcmask 1043456
  %v32 = vsel %vm31, %v24, 0
  %v34 = vsel %vm31, %v26, 0
  %36 = vmatprep.subr.mxu0 %v34
  %37 = vmatpush1.msra.mxu0 %v32
  %38 = vmatprep.subr.mxu0 0.0
  %39 = vmatpush1.msra.mxu0 0.0
  %40 = vmatprep.subr.mxu0 0.0
  %41 = vmatpush1.msra.mxu0 0.0
  %42 = vmatprep.subr.mxu0 0.0
  %43 = vmatpush1.msra.mxu0 0.0
  %44 = vmatprep.subr.mxu0 0.0
  %45 = vmatpush1.msra.mxu0 0.0
  %46 = vmatprep.subr.mxu0 0.0
  %47 = vmatpush1.msra.mxu0 0.0
  %48 = vmatprep.subr.mxu0 0.0
  %49 = vmatpush1.msra.mxu0 0.0
  %50 = vmatprep.subr.mxu0 0.0
  %51 = vmatpush1.msra.mxu0 0.0
  %52 = vmatprep.subr.mxu0 0.0
  %53 = vmatpush1.msra.mxu0 0.0
  %54 = vmatprep.subr.mxu0 0.0
  %55 = vmatpush1.msra.mxu0 0.0
  %56 = vmatprep.subr.mxu0 0.0
  %57 = vmatpush1.msra.mxu0 0.0
  %58 = vmatprep.subr.mxu0 0.0
  %59 = vmatpush1.msra.mxu0 0.0
  %60 = vmatprep.subr.mxu0 0.0
  %61 = vmatpush1.msra.mxu0 0.0
  %62 = vmatprep.subr.mxu0 0.0
  %63 = vmatpush1.msra.mxu0 0.0
  %64 = vmatprep.subr.mxu0 0.0
  %65 = vmatpush1.msra.mxu0 0.0
  %66 = vmatprep.subr.mxu0 0.0
  %67 = vmatpush1.msra.mxu0 0.0
  %68 = vmatprep.subr.mxu0 0.0
  %69 = vmatpush1.msra.mxu0 0.0
  %70 = vmatprep.subr.mxu0 0.0
  %71 = vmatpush1.msra.mxu0 0.0
  %72 = vmatprep.subr.mxu0 0.0
  %73 = vmatpush1.msra.mxu0 0.0
  %74 = vmatprep.subr.mxu0 0.0
  %75 = vmatpush1.msra.mxu0 0.0
  %76 = vmatprep.subr.mxu0 0.0
  %77 = vmatpush1.msra.mxu0 0.0
  %78 = vmatprep.subr.mxu0 0.0
  %79 = vmatpush1.msra.mxu0 0.0
  %80 = vmatprep.subr.mxu0 0.0
  %81 = vmatpush1.msra.mxu0 0.0
  %82 = vmatprep.subr.mxu0 0.0
  %83 = vmatpush1.msra.mxu0 0.0
  %84 = vmatprep.subr.mxu0 0.0
  %85 = vmatpush1.msra.mxu0 0.0
  %86 = vmatprep.subr.mxu0 0.0
  %87 = vmatpush1.msra.mxu0 0.0
  %88 = vmatprep.subr.mxu0 0.0
  %89 = vmatpush1.msra.mxu0 0.0
  %90 = vmatprep.subr.mxu0 0.0
  %91 = vmatpush1.msra.mxu0 0.0
  %92 = vmatprep.subr.mxu0 0.0
  %93 = vmatpush1.msra.mxu0 0.0
  %94 = vmatprep.subr.mxu0 0.0
  %95 = vmatpush1.msra.mxu0 0.0
  %96 = vmatprep.subr.mxu0 0.0
  %97 = vmatpush1.msra.mxu0 0.0
  %98 = vmatprep.subr.mxu0 0.0
  %99 = vmatpush1.msra.mxu0 0.0
  %100 = vmatprep.mubr.f32.mxu0 0.0
  %101 = vmatmul.mubr.f32.gmra.mrb[0].mxu0 %v29
  %v102 = vpop.f32.mrb[0].mxu0
  %v103 = vadd.f32 0.0, %v102
  %v104 = vpop.f32.mrb[0].mxu0
  %v105 = vadd.f32 0.0, %v104
  %106 = vdwg.mxu0
  %v108 = vcombine.high %v23, %v23
  %v110 = vsel %vm27, %v20, 0
  %v112 = vsel %vm31, %v23, 0
  %v114 = vsel %vm31, %v108, 0
  %116 = vmatprep.subr.mxu0 %v114
  %117 = vmatpush1.msra.mxu0 %v112
  %118 = vmatprep.subr.mxu0 0.0
  %119 = vmatpush1.msra.mxu0 0.0
  %120 = vmatprep.subr.mxu0 0.0
  %121 = vmatpush1.msra.mxu0 0.0
  %122 = vmatprep.subr.mxu0 0.0
  %123 = vmatpush1.msra.mxu0 0.0
  %124 = vmatprep.subr.mxu0 0.0
  %125 = vmatpush1.msra.mxu0 0.0
  %126 = vmatprep.subr.mxu0 0.0
  %127 = vmatpush1.msra.mxu0 0.0
  %128 = vmatprep.subr.mxu0 0.0
  %129 = vmatpush1.msra.mxu0 0.0
  %130 = vmatprep.subr.mxu0 0.0
  %131 = vmatpush1.msra.mxu0 0.0
  %132 = vmatprep.subr.mxu0 0.0
  %133 = vmatpush1.msra.mxu0 0.0
  %134 = vmatprep.subr.mxu0 0.0
  %135 = vmatpush1.msra.mxu0 0.0
  %136 = vmatprep.subr.mxu0 0.0
  %137 = vmatpush1.msra.mxu0 0.0
  %138 = vmatprep.subr.mxu0 0.0
  %139 = vmatpush1.msra.mxu0 0.0
  %140 = vmatprep.subr.mxu0 0.0
  %141 = vmatpush1.msra.mxu0 0.0
  %142 = vmatprep.subr.mxu0 0.0
  %143 = vmatpush1.msra.mxu0 0.0
  %144 = vmatprep.subr.mxu0 0.0
  %145 = vmatpush1.msra.mxu0 0.0
  %146 = vmatprep.subr.mxu0 0.0
  %147 = vmatpush1.msra.mxu0 0.0
  %148 = vmatprep.subr.mxu0 0.0
  %149 = vmatpush1.msra.mxu0 0.0
  %150 = vmatprep.subr.mxu0 0.0
  %151 = vmatpush1.msra.mxu0 0.0
  %152 = vmatprep.subr.mxu0 0.0
  %153 = vmatpush1.msra.mxu0 0.0
  %154 = vmatprep.subr.mxu0 0.0
  %155 = vmatpush1.msra.mxu0 0.0
  %156 = vmatprep.subr.mxu0 0.0
  %157 = vmatpush1.msra.mxu0 0.0
  %158 = vmatprep.subr.mxu0 0.0
  %159 = vmatpush1.msra.mxu0 0.0
  %160 = vmatprep.subr.mxu0 0.0
  %161 = vmatpush1.msra.mxu0 0.0
  %162 = vmatprep.subr.mxu0 0.0
  %163 = vmatpush1.msra.mxu0 0.0
  %164 = vmatprep.subr.mxu0 0.0
  %165 = vmatpush1.msra.mxu0 0.0
  %166 = vmatprep.subr.mxu0 0.0
  %167 = vmatpush1.msra.mxu0 0.0
  %168 = vmatprep.subr.mxu0 0.0
  %169 = vmatpush1.msra.mxu0 0.0
  %170 = vmatprep.subr.mxu0 0.0
  %171 = vmatpush1.msra.mxu0 0.0
  %172 = vmatprep.subr.mxu0 0.0
  %173 = vmatpush1.msra.mxu0 0.0
  %174 = vmatprep.subr.mxu0 0.0
  %175 = vmatpush1.msra.mxu0 0.0
  %176 = vmatprep.subr.mxu0 0.0
  %177 = vmatpush1.msra.mxu0 0.0
  %178 = vmatprep.subr.mxu0 0.0
  %179 = vmatpush1.msra.mxu0 0.0
  %180 = vmatprep.mubr.f32.mxu0 0.0
  %181 = vmatmul.mubr.f32.gmra.mrb[0].mxu0 %v110
  %v182 = vpop.f32.mrb[0].mxu0
  %v183 = vadd.f32 %v103, %v182
  %v184 = vpop.f32.mrb[0].mxu0
  %v185 = vadd.f32 %v105, %v184
  %186 = vdwg.mxu0
  %188 = vset.pattern.permute.xlu0 0
  %189 = vperm.xlu0 %188, %v22
  %v190 = vpop.permute.xlu0 %189
  %v192 = vadd.f32 %v183, %v190
  %v193 = vadd.f32 %v185, %v190
  %vm194 = vcmp.ge.f32.partialorder %v192, 0.0
  %vm195 = vcmp.ge.f32.partialorder %v193, 0.0
  %v196 = vmul.f32 %v192, 0.1
  %v197 = vmul.f32 %v193, 0.1
  %v198 = vsel %vm194, %v192, %v196
  %v199 = vsel %vm195, %v193, %v197
  %v202 = vcombine.low %v198, %v199
  %204 = vst [vmem:[%s5] sm:$0xff] %v202
  %s205 = scalar_lea.vmem %s0, 8
  %v206 = vld [vmem:[%s205] sm:$0xff]
  %s207 = scalar_lea.vmem %s1, 8
  %v208 = vld [vmem:[%s207] sm:$0xff]
  %v210 = vcombine.high %v208, %v208
  %v211 = vsel %vm31, %v208, 0
  %v213 = vsel %vm31, %v210, 0
  %215 = vmatprep.subr.mxu0 %v213
  %216 = vmatpush1.msra.mxu0 %v211
  %217 = vmatprep.subr.mxu0 0.0
  %218 = vmatpush1.msra.mxu0 0.0
  %219 = vmatprep.subr.mxu0 0.0
  %220 = vmatpush1.msra.mxu0 0.0
  %221 = vmatprep.subr.mxu0 0.0
  %222 = vmatpush1.msra.mxu0 0.0
  %223 = vmatprep.subr.mxu0 0.0
  %224 = vmatpush1.msra.mxu0 0.0
  %225 = vmatprep.subr.mxu0 0.0
  %226 = vmatpush1.msra.mxu0 0.0
  %227 = vmatprep.subr.mxu0 0.0
  %228 = vmatpush1.msra.mxu0 0.0
  %229 = vmatprep.subr.mxu0 0.0
  %230 = vmatpush1.msra.mxu0 0.0
  %231 = vmatprep.subr.mxu0 0.0
  %232 = vmatpush1.msra.mxu0 0.0
  %233 = vmatprep.subr.mxu0 0.0
  %234 = vmatpush1.msra.mxu0 0.0
  %235 = vmatprep.subr.mxu0 0.0
  %236 = vmatpush1.msra.mxu0 0.0
  %237 = vmatprep.subr.mxu0 0.0
  %238 = vmatpush1.msra.mxu0 0.0
  %239 = vmatprep.subr.mxu0 0.0
  %240 = vmatpush1.msra.mxu0 0.0
  %241 = vmatprep.subr.mxu0 0.0
  %242 = vmatpush1.msra.mxu0 0.0
  %243 = vmatprep.subr.mxu0 0.0
  %244 = vmatpush1.msra.mxu0 0.0
  %245 = vmatprep.subr.mxu0 0.0
  %246 = vmatpush1.msra.mxu0 0.0
  %247 = vmatprep.subr.mxu0 0.0
  %248 = vmatpush1.msra.mxu0 0.0
  %249 = vmatprep.subr.mxu0 0.0
  %250 = vmatpush1.msra.mxu0 0.0
  %251 = vmatprep.subr.mxu0 0.0
  %252 = vmatpush1.msra.mxu0 0.0
  %253 = vmatprep.subr.mxu0 0.0
  %254 = vmatpush1.msra.mxu0 0.0
  %255 = vmatprep.subr.mxu0 0.0
  %256 = vmatpush1.msra.mxu0 0.0
  %257 = vmatprep.subr.mxu0 0.0
  %258 = vmatpush1.msra.mxu0 0.0
  %259 = vmatprep.subr.mxu0 0.0
  %260 = vmatpush1.msra.mxu0 0.0
  %261 = vmatprep.subr.mxu0 0.0
  %262 = vmatpush1.msra.mxu0 0.0
  %263 = vmatprep.subr.mxu0 0.0
  %264 = vmatpush1.msra.mxu0 0.0
  %265 = vmatprep.subr.mxu0 0.0
  %266 = vmatpush1.msra.mxu0 0.0
  %267 = vmatprep.subr.mxu0 0.0
  %268 = vmatpush1.msra.mxu0 0.0
  %269 = vmatprep.subr.mxu0 0.0
  %270 = vmatpush1.msra.mxu0 0.0
  %271 = vmatprep.subr.mxu0 0.0
  %272 = vmatpush1.msra.mxu0 0.0
  %273 = vmatprep.subr.mxu0 0.0
  %274 = vmatpush1.msra.mxu0 0.0
  %275 = vmatprep.subr.mxu0 0.0
  %276 = vmatpush1.msra.mxu0 0.0
  %277 = vmatprep.subr.mxu0 0.0
  %278 = vmatpush1.msra.mxu0 0.0
  %279 = vmatprep.mubr.f32.mxu0 0.0
  %280 = vmatmul.mubr.f32.gmra.mrb[0].mxu0 %v29
  %v281 = vpop.f32.mrb[0].mxu0
  %v282 = vadd.f32 0.0, %v281
  %v283 = vpop.f32.mrb[0].mxu0
  %v284 = vadd.f32 0.0, %v283
  %285 = vdwg.mxu0
  %v287 = vcombine.high %v206, %v206
  %v288 = vsel %vm31, %v206, 0
  %v290 = vsel %vm31, %v287, 0
  %292 = vmatprep.subr.mxu0 %v290
  %293 = vmatpush1.msra.mxu0 %v288
  %294 = vmatprep.subr.mxu0 0.0
  %295 = vmatpush1.msra.mxu0 0.0
  %296 = vmatprep.subr.mxu0 0.0
  %297 = vmatpush1.msra.mxu0 0.0
  %298 = vmatprep.subr.mxu0 0.0
  %299 = vmatpush1.msra.mxu0 0.0
  %300 = vmatprep.subr.mxu0 0.0
  %301 = vmatpush1.msra.mxu0 0.0
  %302 = vmatprep.subr.mxu0 0.0
  %303 = vmatpush1.msra.mxu0 0.0
  %304 = vmatprep.subr.mxu0 0.0
  %305 = vmatpush1.msra.mxu0 0.0
  %306 = vmatprep.subr.mxu0 0.0
  %307 = vmatpush1.msra.mxu0 0.0
  %308 = vmatprep.subr.mxu0 0.0
  %309 = vmatpush1.msra.mxu0 0.0
  %310 = vmatprep.subr.mxu0 0.0
  %311 = vmatpush1.msra.mxu0 0.0
  %312 = vmatprep.subr.mxu0 0.0
  %313 = vmatpush1.msra.mxu0 0.0
  %314 = vmatprep.subr.mxu0 0.0
  %315 = vmatpush1.msra.mxu0 0.0
  %316 = vmatprep.subr.mxu0 0.0
  %317 = vmatpush1.msra.mxu0 0.0
  %318 = vmatprep.subr.mxu0 0.0
  %319 = vmatpush1.msra.mxu0 0.0
  %320 = vmatprep.subr.mxu0 0.0
  %321 = vmatpush1.msra.mxu0 0.0
  %322 = vmatprep.subr.mxu0 0.0
  %323 = vmatpush1.msra.mxu0 0.0
  %324 = vmatprep.subr.mxu0 0.0
  %325 = vmatpush1.msra.mxu0 0.0
  %326 = vmatprep.subr.mxu0 0.0
  %327 = vmatpush1.msra.mxu0 0.0
  %328 = vmatprep.subr.mxu0 0.0
  %329 = vmatpush1.msra.mxu0 0.0
  %330 = vmatprep.subr.mxu0 0.0
  %331 = vmatpush1.msra.mxu0 0.0
  %332 = vmatprep.subr.mxu0 0.0
  %333 = vmatpush1.msra.mxu0 0.0
  %334 = vmatprep.subr.mxu0 0.0
  %335 = vmatpush1.msra.mxu0 0.0
  %336 = vmatprep.subr.mxu0 0.0
  %337 = vmatpush1.msra.mxu0 0.0
  %338 = vmatprep.subr.mxu0 0.0
  %339 = vmatpush1.msra.mxu0 0.0
  %340 = vmatprep.subr.mxu0 0.0
  %341 = vmatpush1.msra.mxu0 0.0
  %342 = vmatprep.subr.mxu0 0.0
  %343 = vmatpush1.msra.mxu0 0.0
  %344 = vmatprep.subr.mxu0 0.0
  %345 = vmatpush1.msra.mxu0 0.0
  %346 = vmatprep.subr.mxu0 0.0
  %347 = vmatpush1.msra.mxu0 0.0
  %348 = vmatprep.subr.mxu0 0.0
  %349 = vmatpush1.msra.mxu0 0.0
  %350 = vmatprep.subr.mxu0 0.0
  %351 = vmatpush1.msra.mxu0 0.0
  %352 = vmatprep.subr.mxu0 0.0
  %353 = vmatpush1.msra.mxu0 0.0
  %354 = vmatprep.subr.mxu0 0.0
  %355 = vmatpush1.msra.mxu0 0.0
  %356 = vmatprep.mubr.f32.mxu0 0.0
  %357 = vmatmul.mubr.f32.gmra.mrb[0].mxu0 %v110
  %v358 = vpop.f32.mrb[0].mxu0
  %v359 = vadd.f32 %v282, %v358
  %v360 = vpop.f32.mrb[0].mxu0
  %v361 = vadd.f32 %v284, %v360
  %362 = vdwg.mxu0
  %v363 = vadd.f32 %v359, %v190
  %v364 = vadd.f32 %v361, %v190
  %vm365 = vcmp.ge.f32.partialorder %v363, 0.0
  %vm366 = vcmp.ge.f32.partialorder %v364, 0.0
  %v367 = vmul.f32 %v363, 0.1
  %v368 = vmul.f32 %v364, 0.1
  %v369 = vsel %vm365, %v363, %v367
  %v370 = vsel %vm366, %v364, %v368
  %v373 = vcombine.low %v369, %v370
  %s375 = scalar_lea.vmem %s5, 8
  %376 = vst [vmem:[%s375] sm:$0xff] %v373
  %s377 = scalar_lea.vmem %s0, 16
  %v378 = vld [vmem:[%s377] sm:$0xff]
  %s379 = scalar_lea.vmem %s1, 16
  %v380 = vld [vmem:[%s379] sm:$0xff]
  %v382 = vcombine.high %v380, %v380
  %v383 = vsel %vm31, %v380, 0
  %v385 = vsel %vm31, %v382, 0
  %387 = vmatprep.subr.mxu0 %v385
  %388 = vmatpush1.msra.mxu0 %v383
  %389 = vmatprep.subr.mxu0 0.0
  %390 = vmatpush1.msra.mxu0 0.0
  %391 = vmatprep.subr.mxu0 0.0
  %392 = vmatpush1.msra.mxu0 0.0
  %393 = vmatprep.subr.mxu0 0.0
  %394 = vmatpush1.msra.mxu0 0.0
  %395 = vmatprep.subr.mxu0 0.0
  %396 = vmatpush1.msra.mxu0 0.0
  %397 = vmatprep.subr.mxu0 0.0
  %398 = vmatpush1.msra.mxu0 0.0
  %399 = vmatprep.subr.mxu0 0.0
  %400 = vmatpush1.msra.mxu0 0.0
  %401 = vmatprep.subr.mxu0 0.0
  %402 = vmatpush1.msra.mxu0 0.0
  %403 = vmatprep.subr.mxu0 0.0
  %404 = vmatpush1.msra.mxu0 0.0
  %405 = vmatprep.subr.mxu0 0.0
  %406 = vmatpush1.msra.mxu0 0.0
  %407 = vmatprep.subr.mxu0 0.0
  %408 = vmatpush1.msra.mxu0 0.0
  %409 = vmatprep.subr.mxu0 0.0
  %410 = vmatpush1.msra.mxu0 0.0
  %411 = vmatprep.subr.mxu0 0.0
  %412 = vmatpush1.msra.mxu0 0.0
  %413 = vmatprep.subr.mxu0 0.0
  %414 = vmatpush1.msra.mxu0 0.0
  %415 = vmatprep.subr.mxu0 0.0
  %416 = vmatpush1.msra.mxu0 0.0
  %417 = vmatprep.subr.mxu0 0.0
  %418 = vmatpush1.msra.mxu0 0.0
  %419 = vmatprep.subr.mxu0 0.0
  %420 = vmatpush1.msra.mxu0 0.0
  %421 = vmatprep.subr.mxu0 0.0
  %422 = vmatpush1.msra.mxu0 0.0
  %423 = vmatprep.subr.mxu0 0.0
  %424 = vmatpush1.msra.mxu0 0.0
  %425 = vmatprep.subr.mxu0 0.0
  %426 = vmatpush1.msra.mxu0 0.0
  %427 = vmatprep.subr.mxu0 0.0
  %428 = vmatpush1.msra.mxu0 0.0
  %429 = vmatprep.subr.mxu0 0.0
  %430 = vmatpush1.msra.mxu0 0.0
  %431 = vmatprep.subr.mxu0 0.0
  %432 = vmatpush1.msra.mxu0 0.0
  %433 = vmatprep.subr.mxu0 0.0
  %434 = vmatpush1.msra.mxu0 0.0
  %435 = vmatprep.subr.mxu0 0.0
  %436 = vmatpush1.msra.mxu0 0.0
  %437 = vmatprep.subr.mxu0 0.0
  %438 = vmatpush1.msra.mxu0 0.0
  %439 = vmatprep.subr.mxu0 0.0
  %440 = vmatpush1.msra.mxu0 0.0
  %441 = vmatprep.subr.mxu0 0.0
  %442 = vmatpush1.msra.mxu0 0.0
  %443 = vmatprep.subr.mxu0 0.0
  %444 = vmatpush1.msra.mxu0 0.0
  %445 = vmatprep.subr.mxu0 0.0
  %446 = vmatpush1.msra.mxu0 0.0
  %447 = vmatprep.subr.mxu0 0.0
  %448 = vmatpush1.msra.mxu0 0.0
  %449 = vmatprep.subr.mxu0 0.0
  %450 = vmatpush1.msra.mxu0 0.0
  %451 = vmatprep.mubr.f32.mxu0 0.0
  %452 = vmatmul.mubr.f32.gmra.mrb[0].mxu0 %v29
  %v453 = vpop.f32.mrb[0].mxu0
  %v454 = vadd.f32 0.0, %v453
  %v455 = vpop.f32.mrb[0].mxu0
  %v456 = vadd.f32 0.0, %v455
  %457 = vdwg.mxu0
  %v459 = vcombine.high %v378, %v378
  %v460 = vsel %vm31, %v378, 0
  %v462 = vsel %vm31, %v459, 0
  %464 = vmatprep.subr.mxu0 %v462
  %465 = vmatpush1.msra.mxu0 %v460
  %466 = vmatprep.subr.mxu0 0.0
  %467 = vmatpush1.msra.mxu0 0.0
  %468 = vmatprep.subr.mxu0 0.0
  %469 = vmatpush1.msra.mxu0 0.0
  %470 = vmatprep.subr.mxu0 0.0
  %471 = vmatpush1.msra.mxu0 0.0
  %472 = vmatprep.subr.mxu0 0.0
  %473 = vmatpush1.msra.mxu0 0.0
  %474 = vmatprep.subr.mxu0 0.0
  %475 = vmatpush1.msra.mxu0 0.0
  %476 = vmatprep.subr.mxu0 0.0
  %477 = vmatpush1.msra.mxu0 0.0
  %478 = vmatprep.subr.mxu0 0.0
  %479 = vmatpush1.msra.mxu0 0.0
  %480 = vmatprep.subr.mxu0 0.0
  %481 = vmatpush1.msra.mxu0 0.0
  %482 = vmatprep.subr.mxu0 0.0
  %483 = vmatpush1.msra.mxu0 0.0
  %484 = vmatprep.subr.mxu0 0.0
  %485 = vmatpush1.msra.mxu0 0.0
  %486 = vmatprep.subr.mxu0 0.0
  %487 = vmatpush1.msra.mxu0 0.0
  %488 = vmatprep.subr.mxu0 0.0
  %489 = vmatpush1.msra.mxu0 0.0
  %490 = vmatprep.subr.mxu0 0.0
  %491 = vmatpush1.msra.mxu0 0.0
  %492 = vmatprep.subr.mxu0 0.0
  %493 = vmatpush1.msra.mxu0 0.0
  %494 = vmatprep.subr.mxu0 0.0
  %495 = vmatpush1.msra.mxu0 0.0
  %496 = vmatprep.subr.mxu0 0.0
  %497 = vmatpush1.msra.mxu0 0.0
  %498 = vmatprep.subr.mxu0 0.0
  %499 = vmatpush1.msra.mxu0 0.0
  %500 = vmatprep.subr.mxu0 0.0
  %501 = vmatpush1.msra.mxu0 0.0
  %502 = vmatprep.subr.mxu0 0.0
  %503 = vmatpush1.msra.mxu0 0.0
  %504 = vmatprep.subr.mxu0 0.0
  %505 = vmatpush1.msra.mxu0 0.0
  %506 = vmatprep.subr.mxu0 0.0
  %507 = vmatpush1.msra.mxu0 0.0
  %508 = vmatprep.subr.mxu0 0.0
  %509 = vmatpush1.msra.mxu0 0.0
  %510 = vmatprep.subr.mxu0 0.0
  %511 = vmatpush1.msra.mxu0 0.0
  %512 = vmatprep.subr.mxu0 0.0
  %513 = vmatpush1.msra.mxu0 0.0
  %514 = vmatprep.subr.mxu0 0.0
  %515 = vmatpush1.msra.mxu0 0.0
  %516 = vmatprep.subr.mxu0 0.0
  %517 = vmatpush1.msra.mxu0 0.0
  %518 = vmatprep.subr.mxu0 0.0
  %519 = vmatpush1.msra.mxu0 0.0
  %520 = vmatprep.subr.mxu0 0.0
  %521 = vmatpush1.msra.mxu0 0.0
  %522 = vmatprep.subr.mxu0 0.0
  %523 = vmatpush1.msra.mxu0 0.0
  %524 = vmatprep.subr.mxu0 0.0
  %525 = vmatpush1.msra.mxu0 0.0
  %526 = vmatprep.subr.mxu0 0.0
  %527 = vmatpush1.msra.mxu0 0.0
  %528 = vmatprep.mubr.f32.mxu0 0.0
  %529 = vmatmul.mubr.f32.gmra.mrb[0].mxu0 %v110
  %v530 = vpop.f32.mrb[0].mxu0
  %v531 = vadd.f32 %v454, %v530
  %v532 = vpop.f32.mrb[0].mxu0
  %v533 = vadd.f32 %v456, %v532
  %534 = vdwg.mxu0
  %v535 = vadd.f32 %v531, %v190
  %v536 = vadd.f32 %v533, %v190
  %vm537 = vcmp.ge.f32.partialorder %v535, 0.0
  %vm538 = vcmp.ge.f32.partialorder %v536, 0.0
  %v539 = vmul.f32 %v535, 0.1
  %v540 = vmul.f32 %v536, 0.1
  %v541 = vsel %vm537, %v535, %v539
  %v542 = vsel %vm538, %v536, %v540
  %v545 = vcombine.low %v541, %v542
  %s547 = scalar_lea.vmem %s5, 16
  %548 = vst [vmem:[%s547] sm:$0xff] %v545
  %s549 = scalar_lea.vmem %s0, 24
  %v550 = vld [vmem:[%s549] sm:$0xff]
  %s551 = scalar_lea.vmem %s1, 24
  %v552 = vld [vmem:[%s551] sm:$0xff]
  %v554 = vcombine.high %v552, %v552
  %v555 = vsel %vm31, %v552, 0
  %v557 = vsel %vm31, %v554, 0
  %559 = vmatprep.subr.mxu0 %v557
  %560 = vmatpush1.msra.mxu0 %v555
  %561 = vmatprep.subr.mxu0 0.0
  %562 = vmatpush1.msra.mxu0 0.0
  %563 = vmatprep.subr.mxu0 0.0
  %564 = vmatpush1.msra.mxu0 0.0
  %565 = vmatprep.subr.mxu0 0.0
  %566 = vmatpush1.msra.mxu0 0.0
  %567 = vmatprep.subr.mxu0 0.0
  %568 = vmatpush1.msra.mxu0 0.0
  %569 = vmatprep.subr.mxu0 0.0
  %570 = vmatpush1.msra.mxu0 0.0
  %571 = vmatprep.subr.mxu0 0.0
  %572 = vmatpush1.msra.mxu0 0.0
  %573 = vmatprep.subr.mxu0 0.0
  %574 = vmatpush1.msra.mxu0 0.0
  %575 = vmatprep.subr.mxu0 0.0
  %576 = vmatpush1.msra.mxu0 0.0
  %577 = vmatprep.subr.mxu0 0.0
  %578 = vmatpush1.msra.mxu0 0.0
  %579 = vmatprep.subr.mxu0 0.0
  %580 = vmatpush1.msra.mxu0 0.0
  %581 = vmatprep.subr.mxu0 0.0
  %582 = vmatpush1.msra.mxu0 0.0
  %583 = vmatprep.subr.mxu0 0.0
  %584 = vmatpush1.msra.mxu0 0.0
  %585 = vmatprep.subr.mxu0 0.0
  %586 = vmatpush1.msra.mxu0 0.0
  %587 = vmatprep.subr.mxu0 0.0
  %588 = vmatpush1.msra.mxu0 0.0
  %589 = vmatprep.subr.mxu0 0.0
  %590 = vmatpush1.msra.mxu0 0.0
  %591 = vmatprep.subr.mxu0 0.0
  %592 = vmatpush1.msra.mxu0 0.0
  %593 = vmatprep.subr.mxu0 0.0
  %594 = vmatpush1.msra.mxu0 0.0
  %595 = vmatprep.subr.mxu0 0.0
  %596 = vmatpush1.msra.mxu0 0.0
  %597 = vmatprep.subr.mxu0 0.0
  %598 = vmatpush1.msra.mxu0 0.0
  %599 = vmatprep.subr.mxu0 0.0
  %600 = vmatpush1.msra.mxu0 0.0
  %601 = vmatprep.subr.mxu0 0.0
  %602 = vmatpush1.msra.mxu0 0.0
  %603 = vmatprep.subr.mxu0 0.0
  %604 = vmatpush1.msra.mxu0 0.0
  %605 = vmatprep.subr.mxu0 0.0
  %606 = vmatpush1.msra.mxu0 0.0
  %607 = vmatprep.subr.mxu0 0.0
  %608 = vmatpush1.msra.mxu0 0.0
  %609 = vmatprep.subr.mxu0 0.0
  %610 = vmatpush1.msra.mxu0 0.0
  %611 = vmatprep.subr.mxu0 0.0
  %612 = vmatpush1.msra.mxu0 0.0
  %613 = vmatprep.subr.mxu0 0.0
  %614 = vmatpush1.msra.mxu0 0.0
  %615 = vmatprep.subr.mxu0 0.0
  %616 = vmatpush1.msra.mxu0 0.0
  %617 = vmatprep.subr.mxu0 0.0
  %618 = vmatpush1.msra.mxu0 0.0
  %619 = vmatprep.subr.mxu0 0.0
  %620 = vmatpush1.msra.mxu0 0.0
  %621 = vmatprep.subr.mxu0 0.0
  %622 = vmatpush1.msra.mxu0 0.0
  %623 = vmatprep.mubr.f32.mxu0 0.0
  %624 = vmatmul.mubr.f32.gmra.mrb[0].mxu0 %v29
  %v625 = vpop.f32.mrb[0].mxu0
  %v626 = vadd.f32 0.0, %v625
  %v627 = vpop.f32.mrb[0].mxu0
  %v628 = vadd.f32 0.0, %v627
  %629 = vdwg.mxu0
  %v631 = vcombine.high %v550, %v550
  %v632 = vsel %vm31, %v550, 0
  %v634 = vsel %vm31, %v631, 0
  %636 = vmatprep.subr.mxu0 %v634
  %637 = vmatpush1.msra.mxu0 %v632
  %638 = vmatprep.subr.mxu0 0.0
  %639 = vmatpush1.msra.mxu0 0.0
  %640 = vmatprep.subr.mxu0 0.0
  %641 = vmatpush1.msra.mxu0 0.0
  %642 = vmatprep.subr.mxu0 0.0
  %643 = vmatpush1.msra.mxu0 0.0
  %644 = vmatprep.subr.mxu0 0.0
  %645 = vmatpush1.msra.mxu0 0.0
  %646 = vmatprep.subr.mxu0 0.0
  %647 = vmatpush1.msra.mxu0 0.0
  %648 = vmatprep.subr.mxu0 0.0
  %649 = vmatpush1.msra.mxu0 0.0
  %650 = vmatprep.subr.mxu0 0.0
  %651 = vmatpush1.msra.mxu0 0.0
  %652 = vmatprep.subr.mxu0 0.0
  %653 = vmatpush1.msra.mxu0 0.0
  %654 = vmatprep.subr.mxu0 0.0
  %655 = vmatpush1.msra.mxu0 0.0
  %656 = vmatprep.subr.mxu0 0.0
  %657 = vmatpush1.msra.mxu0 0.0
  %658 = vmatprep.subr.mxu0 0.0
  %659 = vmatpush1.msra.mxu0 0.0
  %660 = vmatprep.subr.mxu0 0.0
  %661 = vmatpush1.msra.mxu0 0.0
  %662 = vmatprep.subr.mxu0 0.0
  %663 = vmatpush1.msra.mxu0 0.0
  %664 = vmatprep.subr.mxu0 0.0
  %665 = vmatpush1.msra.mxu0 0.0
  %666 = vmatprep.subr.mxu0 0.0
  %667 = vmatpush1.msra.mxu0 0.0
  %668 = vmatprep.subr.mxu0 0.0
  %669 = vmatpush1.msra.mxu0 0.0
  %670 = vmatprep.subr.mxu0 0.0
  %671 = vmatpush1.msra.mxu0 0.0
  %672 = vmatprep.subr.mxu0 0.0
  %673 = vmatpush1.msra.mxu0 0.0
  %674 = vmatprep.subr.mxu0 0.0
  %675 = vmatpush1.msra.mxu0 0.0
  %676 = vmatprep.subr.mxu0 0.0
  %677 = vmatpush1.msra.mxu0 0.0
  %678 = vmatprep.subr.mxu0 0.0
  %679 = vmatpush1.msra.mxu0 0.0
  %680 = vmatprep.subr.mxu0 0.0
  %681 = vmatpush1.msra.mxu0 0.0
  %682 = vmatprep.subr.mxu0 0.0
  %683 = vmatpush1.msra.mxu0 0.0
  %684 = vmatprep.subr.mxu0 0.0
  %685 = vmatpush1.msra.mxu0 0.0
  %686 = vmatprep.subr.mxu0 0.0
  %687 = vmatpush1.msra.mxu0 0.0
  %688 = vmatprep.subr.mxu0 0.0
  %689 = vmatpush1.msra.mxu0 0.0
  %690 = vmatprep.subr.mxu0 0.0
  %691 = vmatpush1.msra.mxu0 0.0
  %692 = vmatprep.subr.mxu0 0.0
  %693 = vmatpush1.msra.mxu0 0.0
  %694 = vmatprep.subr.mxu0 0.0
  %695 = vmatpush1.msra.mxu0 0.0
  %696 = vmatprep.subr.mxu0 0.0
  %697 = vmatpush1.msra.mxu0 0.0
  %698 = vmatprep.subr.mxu0 0.0
  %699 = vmatpush1.msra.mxu0 0.0
  %700 = vmatprep.mubr.f32.mxu0 0.0
  %701 = vmatmul.mubr.f32.gmra.mrb[0].mxu0 %v110
  %v702 = vpop.f32.mrb[0].mxu0
  %v703 = vadd.f32 %v626, %v702
  %v704 = vpop.f32.mrb[0].mxu0
  %v705 = vadd.f32 %v628, %v704
  %706 = vdwg.mxu0
  %v707 = vadd.f32 %v703, %v190
  %v708 = vadd.f32 %v705, %v190
  %vm709 = vcmp.ge.f32.partialorder %v707, 0.0
  %vm710 = vcmp.ge.f32.partialorder %v708, 0.0
  %v711 = vmul.f32 %v707, 0.1
  %v712 = vmul.f32 %v708, 0.1
  %v713 = vsel %vm709, %v707, %v711
  %v714 = vsel %vm710, %v708, %v712
  %v717 = vcombine.low %v713, %v714
  %s719 = scalar_lea.vmem %s5, 24
  %720 = vst [vmem:[%s719] sm:$0xff] %v717
  %s721 = scalar_lea.vmem %s0, 32
  %v722 = vld [vmem:[%s721] sm:$0xff]
  %s723 = scalar_lea.vmem %s1, 32
  %v724 = vld [vmem:[%s723] sm:$0xff]
  %v726 = vcombine.high %v724, %v724
  %v727 = vsel %vm31, %v724, 0
  %v729 = vsel %vm31, %v726, 0
  %731 = vmatprep.subr.mxu0 %v729
  %732 = vmatpush1.msra.mxu0 %v727
  %733 = vmatprep.subr.mxu0 0.0
  %734 = vmatpush1.msra.mxu0 0.0
  %735 = vmatprep.subr.mxu0 0.0
  %736 = vmatpush1.msra.mxu0 0.0
  %737 = vmatprep.subr.mxu0 0.0
  %738 = vmatpush1.msra.mxu0 0.0
  %739 = vmatprep.subr.mxu0 0.0
  %740 = vmatpush1.msra.mxu0 0.0
  %741 = vmatprep.subr.mxu0 0.0
  %742 = vmatpush1.msra.mxu0 0.0
  %743 = vmatprep.subr.mxu0 0.0
  %744 = vmatpush1.msra.mxu0 0.0
  %745 = vmatprep.subr.mxu0 0.0
  %746 = vmatpush1.msra.mxu0 0.0
  %747 = vmatprep.subr.mxu0 0.0
  %748 = vmatpush1.msra.mxu0 0.0
  %749 = vmatprep.subr.mxu0 0.0
  %750 = vmatpush1.msra.mxu0 0.0
  %751 = vmatprep.subr.mxu0 0.0
  %752 = vmatpush1.msra.mxu0 0.0
  %753 = vmatprep.subr.mxu0 0.0
  %754 = vmatpush1.msra.mxu0 0.0
  %755 = vmatprep.subr.mxu0 0.0
  %756 = vmatpush1.msra.mxu0 0.0
  %757 = vmatprep.subr.mxu0 0.0
  %758 = vmatpush1.msra.mxu0 0.0
  %759 = vmatprep.subr.mxu0 0.0
  %760 = vmatpush1.msra.mxu0 0.0
  %761 = vmatprep.subr.mxu0 0.0
  %762 = vmatpush1.msra.mxu0 0.0
  %763 = vmatprep.subr.mxu0 0.0
  %764 = vmatpush1.msra.mxu0 0.0
  %765 = vmatprep.subr.mxu0 0.0
  %766 = vmatpush1.msra.mxu0 0.0
  %767 = vmatprep.subr.mxu0 0.0
  %768 = vmatpush1.msra.mxu0 0.0
  %769 = vmatprep.subr.mxu0 0.0
  %770 = vmatpush1.msra.mxu0 0.0
  %771 = vmatprep.subr.mxu0 0.0
  %772 = vmatpush1.msra.mxu0 0.0
  %773 = vmatprep.subr.mxu0 0.0
  %774 = vmatpush1.msra.mxu0 0.0
  %775 = vmatprep.subr.mxu0 0.0
  %776 = vmatpush1.msra.mxu0 0.0
  %777 = vmatprep.subr.mxu0 0.0
  %778 = vmatpush1.msra.mxu0 0.0
  %779 = vmatprep.subr.mxu0 0.0
  %780 = vmatpush1.msra.mxu0 0.0
  %781 = vmatprep.subr.mxu0 0.0
  %782 = vmatpush1.msra.mxu0 0.0
  %783 = vmatprep.subr.mxu0 0.0
  %784 = vmatpush1.msra.mxu0 0.0
  %785 = vmatprep.subr.mxu0 0.0
  %786 = vmatpush1.msra.mxu0 0.0
  %787 = vmatprep.subr.mxu0 0.0
  %788 = vmatpush1.msra.mxu0 0.0
  %789 = vmatprep.subr.mxu0 0.0
  %790 = vmatpush1.msra.mxu0 0.0
  %791 = vmatprep.subr.mxu0 0.0
  %792 = vmatpush1.msra.mxu0 0.0
  %793 = vmatprep.subr.mxu0 0.0
  %794 = vmatpush1.msra.mxu0 0.0
  %795 = vmatprep.mubr.f32.mxu0 0.0
  %796 = vmatmul.mubr.f32.gmra.mrb[0].mxu0 %v29
  %v797 = vpop.f32.mrb[0].mxu0
  %v798 = vadd.f32 0.0, %v797
  %v799 = vpop.f32.mrb[0].mxu0
  %v800 = vadd.f32 0.0, %v799
  %801 = vdwg.mxu0
  %v803 = vcombine.high %v722, %v722
  %v804 = vsel %vm31, %v722, 0
  %v806 = vsel %vm31, %v803, 0
  %808 = vmatprep.subr.mxu0 %v806
  %809 = vmatpush1.msra.mxu0 %v804
  %810 = vmatprep.subr.mxu0 0.0
  %811 = vmatpush1.msra.mxu0 0.0
  %812 = vmatprep.subr.mxu0 0.0
  %813 = vmatpush1.msra.mxu0 0.0
  %814 = vmatprep.subr.mxu0 0.0
  %815 = vmatpush1.msra.mxu0 0.0
  %816 = vmatprep.subr.mxu0 0.0
  %817 = vmatpush1.msra.mxu0 0.0
  %818 = vmatprep.subr.mxu0 0.0
  %819 = vmatpush1.msra.mxu0 0.0
  %820 = vmatprep.subr.mxu0 0.0
  %821 = vmatpush1.msra.mxu0 0.0
  %822 = vmatprep.subr.mxu0 0.0
  %823 = vmatpush1.msra.mxu0 0.0
  %824 = vmatprep.subr.mxu0 0.0
  %825 = vmatpush1.msra.mxu0 0.0
  %826 = vmatprep.subr.mxu0 0.0
  %827 = vmatpush1.msra.mxu0 0.0
  %828 = vmatprep.subr.mxu0 0.0
  %829 = vmatpush1.msra.mxu0 0.0
  %830 = vmatprep.subr.mxu0 0.0
  %831 = vmatpush1.msra.mxu0 0.0
  %832 = vmatprep.subr.mxu0 0.0
  %833 = vmatpush1.msra.mxu0 0.0
  %834 = vmatprep.subr.mxu0 0.0
  %835 = vmatpush1.msra.mxu0 0.0
  %836 = vmatprep.subr.mxu0 0.0
  %837 = vmatpush1.msra.mxu0 0.0
  %838 = vmatprep.subr.mxu0 0.0
  %839 = vmatpush1.msra.mxu0 0.0
  %840 = vmatprep.subr.mxu0 0.0
  %841 = vmatpush1.msra.mxu0 0.0
  %842 = vmatprep.subr.mxu0 0.0
  %843 = vmatpush1.msra.mxu0 0.0
  %844 = vmatprep.subr.mxu0 0.0
  %845 = vmatpush1.msra.mxu0 0.0
  %846 = vmatprep.subr.mxu0 0.0
  %847 = vmatpush1.msra.mxu0 0.0
  %848 = vmatprep.subr.mxu0 0.0
  %849 = vmatpush1.msra.mxu0 0.0
  %850 = vmatprep.subr.mxu0 0.0
  %851 = vmatpush1.msra.mxu0 0.0
  %852 = vmatprep.subr.mxu0 0.0
  %853 = vmatpush1.msra.mxu0 0.0
  %854 = vmatprep.subr.mxu0 0.0
  %855 = vmatpush1.msra.mxu0 0.0
  %856 = vmatprep.subr.mxu0 0.0
  %857 = vmatpush1.msra.mxu0 0.0
  %858 = vmatprep.subr.mxu0 0.0
  %859 = vmatpush1.msra.mxu0 0.0
  %860 = vmatprep.subr.mxu0 0.0
  %861 = vmatpush1.msra.mxu0 0.0
  %862 = vmatprep.subr.mxu0 0.0
  %863 = vmatpush1.msra.mxu0 0.0
  %864 = vmatprep.subr.mxu0 0.0
  %865 = vmatpush1.msra.mxu0 0.0
  %866 = vmatprep.subr.mxu0 0.0
  %867 = vmatpush1.msra.mxu0 0.0
  %868 = vmatprep.subr.mxu0 0.0
  %869 = vmatpush1.msra.mxu0 0.0
  %870 = vmatprep.subr.mxu0 0.0
  %871 = vmatpush1.msra.mxu0 0.0
  %872 = vmatprep.mubr.f32.mxu0 0.0
  %873 = vmatmul.mubr.f32.gmra.mrb[0].mxu0 %v110
  %v874 = vpop.f32.mrb[0].mxu0
  %v875 = vadd.f32 %v798, %v874
  %v876 = vpop.f32.mrb[0].mxu0
  %v877 = vadd.f32 %v800, %v876
  %878 = vdwg.mxu0
  %v879 = vadd.f32 %v875, %v190
  %v880 = vadd.f32 %v877, %v190
  %vm881 = vcmp.ge.f32.partialorder %v879, 0.0
  %vm882 = vcmp.ge.f32.partialorder %v880, 0.0
  %v883 = vmul.f32 %v879, 0.1
  %v884 = vmul.f32 %v880, 0.1
  %v885 = vsel %vm881, %v879, %v883
  %v886 = vsel %vm882, %v880, %v884
  %v889 = vcombine.low %v885, %v886
  %s891 = scalar_lea.vmem %s5, 32
  %892 = vst [vmem:[%s891] sm:$0xff] %v889
  %s893 = scalar_lea.vmem %s0, 40
  %v894 = vld [vmem:[%s893] sm:$0xff]
  %s895 = scalar_lea.vmem %s1, 40
  %v896 = vld [vmem:[%s895] sm:$0xff]
  %v898 = vcombine.high %v896, %v896
  %v899 = vsel %vm31, %v896, 0
  %v901 = vsel %vm31, %v898, 0
  %903 = vmatprep.subr.mxu0 %v901
  %904 = vmatpush1.msra.mxu0 %v899
  %905 = vmatprep.subr.mxu0 0.0
  %906 = vmatpush1.msra.mxu0 0.0
  %907 = vmatprep.subr.mxu0 0.0
  %908 = vmatpush1.msra.mxu0 0.0
  %909 = vmatprep.subr.mxu0 0.0
  %910 = vmatpush1.msra.mxu0 0.0
  %911 = vmatprep.subr.mxu0 0.0
  %912 = vmatpush1.msra.mxu0 0.0
  %913 = vmatprep.subr.mxu0 0.0
  %914 = vmatpush1.msra.mxu0 0.0
  %915 = vmatprep.subr.mxu0 0.0
  %916 = vmatpush1.msra.mxu0 0.0
  %917 = vmatprep.subr.mxu0 0.0
  %918 = vmatpush1.msra.mxu0 0.0
  %919 = vmatprep.subr.mxu0 0.0
  %920 = vmatpush1.msra.mxu0 0.0
  %921 = vmatprep.subr.mxu0 0.0
  %922 = vmatpush1.msra.mxu0 0.0
  %923 = vmatprep.subr.mxu0 0.0
  %924 = vmatpush1.msra.mxu0 0.0
  %925 = vmatprep.subr.mxu0 0.0
  %926 = vmatpush1.msra.mxu0 0.0
  %927 = vmatprep.subr.mxu0 0.0
  %928 = vmatpush1.msra.mxu0 0.0
  %929 = vmatprep.subr.mxu0 0.0
  %930 = vmatpush1.msra.mxu0 0.0
  %931 = vmatprep.subr.mxu0 0.0
  %932 = vmatpush1.msra.mxu0 0.0
  %933 = vmatprep.subr.mxu0 0.0
  %934 = vmatpush1.msra.mxu0 0.0
  %935 = vmatprep.subr.mxu0 0.0
  %936 = vmatpush1.msra.mxu0 0.0
  %937 = vmatprep.subr.mxu0 0.0
  %938 = vmatpush1.msra.mxu0 0.0
  %939 = vmatprep.subr.mxu0 0.0
  %940 = vmatpush1.msra.mxu0 0.0
  %941 = vmatprep.subr.mxu0 0.0
  %942 = vmatpush1.msra.mxu0 0.0
  %943 = vmatprep.subr.mxu0 0.0
  %944 = vmatpush1.msra.mxu0 0.0
  %945 = vmatprep.subr.mxu0 0.0
  %946 = vmatpush1.msra.mxu0 0.0
  %947 = vmatprep.subr.mxu0 0.0
  %948 = vmatpush1.msra.mxu0 0.0
  %949 = vmatprep.subr.mxu0 0.0
  %950 = vmatpush1.msra.mxu0 0.0
  %951 = vmatprep.subr.mxu0 0.0
  %952 = vmatpush1.msra.mxu0 0.0
  %953 = vmatprep.subr.mxu0 0.0
  %954 = vmatpush1.msra.mxu0 0.0
  %955 = vmatprep.subr.mxu0 0.0
  %956 = vmatpush1.msra.mxu0 0.0
  %957 = vmatprep.subr.mxu0 0.0
  %958 = vmatpush1.msra.mxu0 0.0
  %959 = vmatprep.subr.mxu0 0.0
  %960 = vmatpush1.msra.mxu0 0.0
  %961 = vmatprep.subr.mxu0 0.0
  %962 = vmatpush1.msra.mxu0 0.0
  %963 = vmatprep.subr.mxu0 0.0
  %964 = vmatpush1.msra.mxu0 0.0
  %965 = vmatprep.subr.mxu0 0.0
  %966 = vmatpush1.msra.mxu0 0.0
  %967 = vmatprep.mubr.f32.mxu0 0.0
  %968 = vmatmul.mubr.f32.gmra.mrb[0].mxu0 %v29
  %v969 = vpop.f32.mrb[0].mxu0
  %v970 = vadd.f32 0.0, %v969
  %v971 = vpop.f32.mrb[0].mxu0
  %v972 = vadd.f32 0.0, %v971
  %973 = vdwg.mxu0
  %v975 = vcombine.high %v894, %v894
  %v976 = vsel %vm31, %v894, 0
  %v978 = vsel %vm31, %v975, 0
  %980 = vmatprep.subr.mxu0 %v978
  %981 = vmatpush1.msra.mxu0 %v976
  %982 = vmatprep.subr.mxu0 0.0
  %983 = vmatpush1.msra.mxu0 0.0
  %984 = vmatprep.subr.mxu0 0.0
  %985 = vmatpush1.msra.mxu0 0.0
  %986 = vmatprep.subr.mxu0 0.0
  %987 = vmatpush1.msra.mxu0 0.0
  %988 = vmatprep.subr.mxu0 0.0
  %989 = vmatpush1.msra.mxu0 0.0
  %990 = vmatprep.subr.mxu0 0.0
  %991 = vmatpush1.msra.mxu0 0.0
  %992 = vmatprep.subr.mxu0 0.0
  %993 = vmatpush1.msra.mxu0 0.0
  %994 = vmatprep.subr.mxu0 0.0
  %995 = vmatpush1.msra.mxu0 0.0
  %996 = vmatprep.subr.mxu0 0.0
  %997 = vmatpush1.msra.mxu0 0.0
  %998 = vmatprep.subr.mxu0 0.0
  %999 = vmatpush1.msra.mxu0 0.0
  %1000 = vmatprep.subr.mxu0 0.0
  %1001 = vmatpush1.msra.mxu0 0.0
  %1002 = vmatprep.subr.mxu0 0.0
  %1003 = vmatpush1.msra.mxu0 0.0
  %1004 = vmatprep.subr.mxu0 0.0
  %1005 = vmatpush1.msra.mxu0 0.0
  %1006 = vmatprep.subr.mxu0 0.0
  %1007 = vmatpush1.msra.mxu0 0.0
  %1008 = vmatprep.subr.mxu0 0.0
  %1009 = vmatpush1.msra.mxu0 0.0
  %1010 = vmatprep.subr.mxu0 0.0
  %1011 = vmatpush1.msra.mxu0 0.0
  %1012 = vmatprep.subr.mxu0 0.0
  %1013 = vmatpush1.msra.mxu0 0.0
  %1014 = vmatprep.subr.mxu0 0.0
  %1015 = vmatpush1.msra.mxu0 0.0
  %1016 = vmatprep.subr.mxu0 0.0
  %1017 = vmatpush1.msra.mxu0 0.0
  %1018 = vmatprep.subr.mxu0 0.0
  %1019 = vmatpush1.msra.mxu0 0.0
  %1020 = vmatprep.subr.mxu0 0.0
  %1021 = vmatpush1.msra.mxu0 0.0
  %1022 = vmatprep.subr.mxu0 0.0
  %1023 = vmatpush1.msra.mxu0 0.0
  %1024 = vmatprep.subr.mxu0 0.0
  %1025 = vmatpush1.msra.mxu0 0.0
  %1026 = vmatprep.subr.mxu0 0.0
  %1027 = vmatpush1.msra.mxu0 0.0
  %1028 = vmatprep.subr.mxu0 0.0
  %1029 = vmatpush1.msra.mxu0 0.0
  %1030 = vmatprep.subr.mxu0 0.0
  %1031 = vmatpush1.msra.mxu0 0.0
  %1032 = vmatprep.subr.mxu0 0.0
  %1033 = vmatpush1.msra.mxu0 0.0
  %1034 = vmatprep.subr.mxu0 0.0
  %1035 = vmatpush1.msra.mxu0 0.0
  %1036 = vmatprep.subr.mxu0 0.0
  %1037 = vmatpush1.msra.mxu0 0.0
  %1038 = vmatprep.subr.mxu0 0.0
  %1039 = vmatpush1.msra.mxu0 0.0
  %1040 = vmatprep.subr.mxu0 0.0
  %1041 = vmatpush1.msra.mxu0 0.0
  %1042 = vmatprep.subr.mxu0 0.0
  %1043 = vmatpush1.msra.mxu0 0.0
  %1044 = vmatprep.mubr.f32.mxu0 0.0
  %1045 = vmatmul.mubr.f32.gmra.mrb[0].mxu0 %v110
  %v1046 = vpop.f32.mrb[0].mxu0
  %v1047 = vadd.f32 %v970, %v1046
  %v1048 = vpop.f32.mrb[0].mxu0
  %v1049 = vadd.f32 %v972, %v1048
  %1050 = vdwg.mxu0
  %v1051 = vadd.f32 %v1047, %v190
  %v1052 = vadd.f32 %v1049, %v190
  %vm1053 = vcmp.ge.f32.partialorder %v1051, 0.0
  %vm1054 = vcmp.ge.f32.partialorder %v1052, 0.0
  %v1055 = vmul.f32 %v1051, 0.1
  %v1056 = vmul.f32 %v1052, 0.1
  %v1057 = vsel %vm1053, %v1051, %v1055
  %v1058 = vsel %vm1054, %v1052, %v1056
  %v1061 = vcombine.low %v1057, %v1058
  %s1063 = scalar_lea.vmem %s5, 40
  %1064 = vst [vmem:[%s1063] sm:$0xff] %v1061
  // Predicated region
  $region22: #{fuse_level_pallas.1} parent=0 // pred_check
    _
  $region23: #{fuse_level_pallas.1} parent=0 // pred_check_branch
    %1066 = sbr.rel (0) target = $region25
  $region24: #{fuse_level_pallas.1} parent=0 // pred_region
    _
  $region25: #{fuse_level_pallas.1} parent=0 // pred_fallthru
    _
  // Predicated region
  $region26: #{fuse_level_pallas.1} parent=0 // pred_check
    _
  $region27: #{fuse_level_pallas.1} parent=0 // pred_check_branch
    %1068 = sbr.rel (0) target = $region29
  $region28: #{fuse_level_pallas.1} parent=0 // pred_region
    _
  $region29: #{fuse_level_pallas.1} parent=0 // pred_fallthru
    _

</llo_original>
